<compile_context>
chip_gen: v7x
topology: tpu7x:2x2x1
jax: 0.10.0
libtpu: 0.0.40
codegen_flags: <defaults>
</compile_context>

<pallas_src>
import jax
import jax.numpy as jnp
from jax.experimental import pallas as pl
from jax.experimental.pallas import tpu as pltpu

EPS = 1e-5
LANE = 128        # lane-dense padded feature width
MAX_TILE = 512    # batch rows per grid step (sublane-aligned, VMEM-friendly)


# ----------------------------------------------------------------------------
# Kernel: norm -> 3x (BN-folded Linear + ReLU), fully fused per batch tile
# ----------------------------------------------------------------------------
def mlp_kernel(x_ref,
               w1_ref, b1_ref,
               w2_ref, b2_ref,
               w3_ref, b3_ref,
               o_ref):
    # Input normalization: y = log2(x); y[y < 1] = 0.
    # max(x, 1) avoids log2(0) = -inf (incl. zero-padded rows/lanes) and is
    # exact: any x < 2 maps to log2 < 1 and is zeroed by the where anyway.
    x = x_ref[...]
    y = jnp.log2(jnp.maximum(x, 1.0))
    y = jnp.where(y < 1.0, 0.0, y)

    # Layer 1..3: Linear (BatchNorm pre-folded into W/b) + ReLU.  MXU matmuls
    # accumulate in f32; bias rows broadcast along sublanes.
    y = jnp.maximum(
        jnp.dot(y, w1_ref[...], preferred_element_type=jnp.float32) + b1_ref[...], 0.0)
    y = jnp.maximum(
        jnp.dot(y, w2_ref[...], preferred_element_type=jnp.float32) + b2_ref[...], 0.0)
    y = jnp.maximum(
        jnp.dot(y, w3_ref[...], preferred_element_type=jnp.float32) + b3_ref[...], 0.0)

    o_ref[...] = y.astype(o_ref.dtype)


# ----------------------------------------------------------------------------
# Host-side helpers: BN folding + lane/sublane padding
# ----------------------------------------------------------------------------
def _fold_bn(w, b, gamma, beta, mean, var):
    """Fold inference BatchNorm into the preceding Linear ([in, out] weight)."""
    scale = gamma * jax.lax.rsqrt(var + EPS)      # (1, out)
    w_f = w * scale                               # scale each output column
    b_f = (b - mean) * scale + beta               # (1, out)
    return w_f, b_f


def _pad2(a, rows, cols):
    r, c = a.shape
    return jnp.pad(a, ((0, rows - r), (0, cols - c)))


def torchnn_forward(x, params):
    """x: [batch, input_size] float32; params: flat tuple of 18 arrays
    (w, b, gamma, beta, mean, var) x 3, with w stored as [in, out]."""
    batch, feat = x.shape
    fp = ((feat + LANE - 1) // LANE) * LANE       # lane-dense feature width

    # Fold BN into the Linear layers; zero-pad to the lane-dense width.
    folded = []
    for i in range(3):
        w, b, g, be, m, v = params[6 * i:6 * i + 6]
        wf, bf = _fold_bn(w, b, g, be, m, v)
        folded += [_pad2(wf, fp, fp), _pad2(bf, 1, fp)]

    # Batch tile: multiple of 8 sublanes, capped at MAX_TILE; pad the batch so
    # the grid divides evenly (padded rows produce zeros that are sliced off).
    tb = min(MAX_TILE, max(8, ((batch + 7) // 8) * 8))
    bp = ((batch + tb - 1) // tb) * tb
    x_p = jnp.pad(x, ((0, bp - batch), (0, fp - feat)))

    act_spec = pl.BlockSpec((tb, fp), lambda i: (i, 0))
    w_spec = pl.BlockSpec((fp, fp), lambda i: (0, 0))   # resident across grid
    b_spec = pl.BlockSpec((1, fp), lambda i: (0, 0))    # resident across grid

    out = pl.pallas_call(
        mlp_kernel,
        out_shape=jax.ShapeDtypeStruct((bp, fp), jnp.float32),
        grid_spec=pltpu.PrefetchScalarGridSpec(
            num_scalar_prefetch=0,
            grid=(bp // tb,),
            in_specs=[act_spec,
                      w_spec, b_spec,
                      w_spec, b_spec,
                      w_spec, b_spec],
            out_specs=act_spec,
        ),
        compiler_params=pltpu.CompilerParams(
            dimension_semantics=("parallel",),   # shard batch tiles across TCs
            vmem_limit_bytes=64 * 1024 * 1024,
        ),
        cost_estimate=pl.CostEstimate(
            flops=2 * 3 * bp * fp * fp,
            transcendentals=bp * fp,
            bytes_accessed=4 * (2 * bp * fp + 3 * fp * fp + 3 * fp),
        ),
    )(x_p, *folded)

    return out[:batch, :feat]


# ----------------------------------------------------------------------------
# Synthetic parameters + pure-JAX reference (unfolded BN form) for validation
# ----------------------------------------------------------------------------
def make_params(key, feat):
    """Deterministic synthetic parameters for 3x (Linear + BatchNorm1d)."""
    params = []
    for _ in range(3):
        kw, kb, kg, kbe, km, kv, key = jax.random.split(key, 7)
        w = jax.random.normal(kw, (feat, feat), jnp.float32) * 0.1   # [in, out]
        b = jax.random.normal(kb, (1, feat), jnp.float32) * 0.1
        gamma = 1.0 + 0.1 * jax.random.normal(kg, (1, feat), jnp.float32)
        beta = 0.1 * jax.random.normal(kbe, (1, feat), jnp.float32)
        mean = 0.1 * jax.random.normal(km, (1, feat), jnp.float32)
        var = jnp.abs(jax.random.normal(kv, (1, feat), jnp.float32)) + 0.5
        params += [w, b, gamma, beta, mean, var]
    return tuple(params)


def reference_forward(x, params):
    """Pure-JAX reference with explicit (unfolded) BatchNorm."""
    y = jnp.log2(jnp.maximum(x, 1.0))
    y = jnp.where(y < 1.0, 0.0, y)
    for i in range(3):
        w, b, g, be, m, v = params[6 * i:6 * i + 6]
        y = y @ w + b
        y = (y - m) * jax.lax.rsqrt(v + EPS) * g + be
        y = jnp.maximum(y, 0.0)
    return y


def _make_board(key, batch, feat):
    """Synthetic 2048-like boards: tile values are 0 or powers of two."""
    exps = jax.random.randint(key, (batch, feat), 0, 12)
    return jnp.where(exps == 0, 0.0,
                     jnp.exp2(exps.astype(jnp.float32))).astype(jnp.float32)


if __name__ == "__main__":
    # game_size = (4, 4) like a 2048 board -> input_size = 16 features
    game_size = (4, 4)
    feat = game_size[0] * game_size[1]

    key = jax.random.PRNGKey(0)
    kx1, kx2, kp = jax.random.split(key, 3)
    params = make_params(kp, feat)

    # Case 1: tiny batch (single grid step).
    x1 = _make_board(kx1, 8, feat)
    out1 = jax.block_until_ready(torchnn_forward(x1, params))
    ref1 = reference_forward(x1, params)
    assert out1.shape == (8, feat)
    assert jnp.allclose(out1, ref1, atol=1e-4, rtol=1e-4)

    # Case 2: batch not a multiple of the tile (exercises padding / multi-step grid).
    x2 = _make_board(kx2, 200, feat)
    out2 = jax.block_until_ready(torchnn_forward(x2, params))
    ref2 = reference_forward(x2, params)
    assert out2.shape == (200, feat)
    assert jnp.allclose(out2, ref2, atol=1e-4, rtol=1e-4)

    print("KERNEL_OK")
</pallas_src>

<mosaic_0001>
module attributes {stable_mosaic.version = 11 : i64} {
  func.func @mlp_kernel(%arg0: i32, %arg1: memref<8x128xf32, #tpu.memory_space<vmem>>, %arg2: memref<128x128xf32, #tpu.memory_space<vmem>>, %arg3: memref<1x128xf32, #tpu.memory_space<vmem>>, %arg4: memref<128x128xf32, #tpu.memory_space<vmem>>, %arg5: memref<1x128xf32, #tpu.memory_space<vmem>>, %arg6: memref<128x128xf32, #tpu.memory_space<vmem>>, %arg7: memref<1x128xf32, #tpu.memory_space<vmem>>, %arg8: memref<8x128xf32, #tpu.memory_space<vmem>>) attributes {dimension_semantics = [#tpu.dimension_semantics<parallel>], iteration_bounds = array<i64: 1>, scalar_prefetch = 0 : i64, scratch_operands = 0 : i64, tpu.core_type = #tpu.core_type<tc>, window_params = [{transform_indices = @transform_0, window_bounds = array<i64: 8, 128>}, {pipeline_mode = #tpu.pipeline_mode<synchronous>, transform_indices = @transform_1, window_bounds = array<i64: 128, 128>}, {pipeline_mode = #tpu.pipeline_mode<synchronous>, transform_indices = @transform_2, window_bounds = array<i64: 1, 128>}, {pipeline_mode = #tpu.pipeline_mode<synchronous>, transform_indices = @transform_3, window_bounds = array<i64: 128, 128>}, {pipeline_mode = #tpu.pipeline_mode<synchronous>, transform_indices = @transform_4, window_bounds = array<i64: 1, 128>}, {pipeline_mode = #tpu.pipeline_mode<synchronous>, transform_indices = @transform_5, window_bounds = array<i64: 128, 128>}, {pipeline_mode = #tpu.pipeline_mode<synchronous>, transform_indices = @transform_6, window_bounds = array<i64: 1, 128>}, {transform_indices = @transform_7, window_bounds = array<i64: 8, 128>}]} {
    %c0 = arith.constant 0 : index
    %c0_0 = arith.constant 0 : index
    %0 = vector.load %arg1[%c0, %c0_0] : memref<8x128xf32, #tpu.memory_space<vmem>>, vector<8x128xf32>
    %cst = arith.constant 1.000000e+00 : f32
    %1 = vector.broadcast %cst : f32 to vector<8x128xf32>
    %2 = arith.maximumf %0, %1 : vector<8x128xf32>
    %3 = math.log %2 : vector<8x128xf32>
    %cst_1 = arith.constant 2.000000e+00 : f32
    %4 = math.log %cst_1 : f32
    %5 = vector.broadcast %4 : f32 to vector<8x128xf32>
    %6 = arith.divf %3, %5 : vector<8x128xf32>
    %cst_2 = arith.constant 1.000000e+00 : f32
    %7 = vector.broadcast %cst_2 : f32 to vector<8x128xf32>
    %8 = arith.cmpf olt, %6, %7 : vector<8x128xf32>
    %cst_3 = arith.constant 0.000000e+00 : f32
    %9 = vector.broadcast %cst_3 : f32 to vector<8x128xf32>
    %10 = arith.select %8, %9, %6 : vector<8x128xi1>, vector<8x128xf32>
    %c0_4 = arith.constant 0 : index
    %c0_5 = arith.constant 0 : index
    %11 = vector.load %arg2[%c0_4, %c0_5] : memref<128x128xf32, #tpu.memory_space<vmem>>, vector<128x128xf32>
    %cst_6 = arith.constant dense<0.000000e+00> : vector<8x128xf32>
    %12 = tpu.matmul %10, %11, %cst_6 {dimension_numbers = #tpu.dot_dimension_numbers<[1], [0], [0], [1], [0, 0, 1, 1], [], []>} : vector<8x128xf32>, vector<128x128xf32>, vector<8x128xf32> -> vector<8x128xf32>
    %c0_7 = arith.constant 0 : index
    %c0_8 = arith.constant 0 : index
    %13 = vector.load %arg3[%c0_7, %c0_8] : memref<1x128xf32, #tpu.memory_space<vmem>>, vector<1x128xf32>
    %14 = vector.broadcast %13 : vector<1x128xf32> to vector<8x128xf32>
    %15 = arith.addf %12, %14 : vector<8x128xf32>
    %cst_9 = arith.constant 0.000000e+00 : f32
    %16 = vector.broadcast %cst_9 : f32 to vector<8x128xf32>
    %17 = arith.maximumf %15, %16 : vector<8x128xf32>
    %c0_10 = arith.constant 0 : index
    %c0_11 = arith.constant 0 : index
    %18 = vector.load %arg4[%c0_10, %c0_11] : memref<128x128xf32, #tpu.memory_space<vmem>>, vector<128x128xf32>
    %cst_12 = arith.constant dense<0.000000e+00> : vector<8x128xf32>
    %19 = tpu.matmul %17, %18, %cst_12 {dimension_numbers = #tpu.dot_dimension_numbers<[1], [0], [0], [1], [0, 0, 1, 1], [], []>} : vector<8x128xf32>, vector<128x128xf32>, vector<8x128xf32> -> vector<8x128xf32>
    %c0_13 = arith.constant 0 : index
    %c0_14 = arith.constant 0 : index
    %20 = vector.load %arg5[%c0_13, %c0_14] : memref<1x128xf32, #tpu.memory_space<vmem>>, vector<1x128xf32>
    %21 = vector.broadcast %20 : vector<1x128xf32> to vector<8x128xf32>
    %22 = arith.addf %19, %21 : vector<8x128xf32>
    %cst_15 = arith.constant 0.000000e+00 : f32
    %23 = vector.broadcast %cst_15 : f32 to vector<8x128xf32>
    %24 = arith.maximumf %22, %23 : vector<8x128xf32>
    %c0_16 = arith.constant 0 : index
    %c0_17 = arith.constant 0 : index
    %25 = vector.load %arg6[%c0_16, %c0_17] : memref<128x128xf32, #tpu.memory_space<vmem>>, vector<128x128xf32>
    %cst_18 = arith.constant dense<0.000000e+00> : vector<8x128xf32>
    %26 = tpu.matmul %24, %25, %cst_18 {dimension_numbers = #tpu.dot_dimension_numbers<[1], [0], [0], [1], [0, 0, 1, 1], [], []>} : vector<8x128xf32>, vector<128x128xf32>, vector<8x128xf32> -> vector<8x128xf32>
    %c0_19 = arith.constant 0 : index
    %c0_20 = arith.constant 0 : index
    %27 = vector.load %arg7[%c0_19, %c0_20] : memref<1x128xf32, #tpu.memory_space<vmem>>, vector<1x128xf32>
    %28 = vector.broadcast %27 : vector<1x128xf32> to vector<8x128xf32>
    %29 = arith.addf %26, %28 : vector<8x128xf32>
    %cst_21 = arith.constant 0.000000e+00 : f32
    %30 = vector.broadcast %cst_21 : f32 to vector<8x128xf32>
    %31 = arith.maximumf %29, %30 : vector<8x128xf32>
    %c0_22 = arith.constant 0 : index
    %c0_23 = arith.constant 0 : index
    %32 = vector.load %arg8[%c0_22, %c0_23] : memref<8x128xf32, #tpu.memory_space<vmem>>, vector<8x128xf32>
    tpu.vector_store %arg8[%c0_22, %c0_23], %31 {strides = array<i32>} : memref<8x128xf32, #tpu.memory_space<vmem>>, vector<8x128xf32>,
    return
  }
  func.func @transform_0(%arg0: i32) -> (i32, i32) {
    %c0_i32 = arith.constant 0 : i32
    %c0_i32_0 = arith.constant 0 : i32
    return %arg0, %c0_i32 : i32, i32
  }
  func.func @transform_1(%arg0: i32) -> (i32, i32) {
    %c0_i32 = arith.constant 0 : i32
    %c0_i32_0 = arith.constant 0 : i32
    %c0_i32_1 = arith.constant 0 : i32
    return %c0_i32, %c0_i32_0 : i32, i32
  }
  func.func @transform_2(%arg0: i32) -> (i32, i32) {
    %c0_i32 = arith.constant 0 : i32
    %c0_i32_0 = arith.constant 0 : i32
    %c0_i32_1 = arith.constant 0 : i32
    return %c0_i32, %c0_i32_0 : i32, i32
  }
  func.func @transform_3(%arg0: i32) -> (i32, i32) {
    %c0_i32 = arith.constant 0 : i32
    %c0_i32_0 = arith.constant 0 : i32
    %c0_i32_1 = arith.constant 0 : i32
    return %c0_i32, %c0_i32_0 : i32, i32
  }
  func.func @transform_4(%arg0: i32) -> (i32, i32) {
    %c0_i32 = arith.constant 0 : i32
    %c0_i32_0 = arith.constant 0 : i32
    %c0_i32_1 = arith.constant 0 : i32
    return %c0_i32, %c0_i32_0 : i32, i32
  }
  func.func @transform_5(%arg0: i32) -> (i32, i32) {
    %c0_i32 = arith.constant 0 : i32
    %c0_i32_0 = arith.constant 0 : i32
    %c0_i32_1 = arith.constant 0 : i32
    return %c0_i32, %c0_i32_0 : i32, i32
  }
  func.func @transform_6(%arg0: i32) -> (i32, i32) {
    %c0_i32 = arith.constant 0 : i32
    %c0_i32_0 = arith.constant 0 : i32
    %c0_i32_1 = arith.constant 0 : i32
    return %c0_i32, %c0_i32_0 : i32, i32
  }
  func.func @transform_7(%arg0: i32) -> (i32, i32) {
    %c0_i32 = arith.constant 0 : i32
    %c0_i32_0 = arith.constant 0 : i32
    return %arg0, %c0_i32 : i32, i32
  }
}

</mosaic_0001>

<llo_original>
// kernel: tpu_custom_call.1
$region0: #{tpu_custom_call.1}
  #allocation0 [shape = 'u32[]', space=smem, size = 0x4, offset = 0x4, fixed_abs, tag = 'smem constant byte address 0x4 - core index']
  #allocation1 [shape = 'u32[144,128]{1,0:T(1,128)}', space=vmem, size = 0x12000, scoped, tag = 'internal scratch']
  %s0 = inlined_call_operand.hbm [shape: f32[8,128], index: 0, kind: input, shape index: {}]
  %s1 = inlined_call_operand.hbm [shape: f32[128,128], index: 1, kind: input, shape index: {}]
  %s2 = inlined_call_operand.hbm [shape: f32[1,128], index: 2, kind: input, shape index: {}]
  %s3 = inlined_call_operand.hbm [shape: f32[128,128], index: 3, kind: input, shape index: {}]
  %s4 = inlined_call_operand.hbm [shape: f32[1,128], index: 4, kind: input, shape index: {}]
  %s5 = inlined_call_operand.hbm [shape: f32[128,128], index: 5, kind: input, shape index: {}]
  %s6 = inlined_call_operand.hbm [shape: f32[1,128], index: 6, kind: input, shape index: {}]
  %s7 = inlined_call_operand.hbm [shape: f32[8,128], index: 7, kind: output, shape index: {}]
  %s8 = sld [smem:[#allocation0]]
  $region66: #{tpu_custom_call.1} parent=0
    _
  %s10 = ssub.s32 1, %s8
  %s11 = scalar_select 0, %s10, %s8
  $region1: #{tpu_custom_call.1} parent=0
    #allocation2 [shape = 'u8[4096]{0}', space=vmem, size = 0x1000, scoped, tag = 'input window, operand 0, single buffered']
    #allocation3 [shape = 's32[1]{0}', space=sflag, size = 0x4, scoped, tag = 'scoped memory for tpu_custom_call.1']
    #allocation4 [shape = 's32[1]{0}', space=sflag, size = 0x4, scoped, tag = 'scoped memory for tpu_custom_call.1']
    #allocation5 [shape = 'u8[65536]{0}', space=vmem, size = 0x10000, scoped, tag = 'input window, operand 1, single buffered']
    #allocation6 [shape = 's32[1]{0}', space=sflag, size = 0x4, scoped, tag = 'scoped memory for tpu_custom_call.1']
    #allocation7 [shape = 'u8[512]{0}', space=vmem, size = 0x400, scoped, tag = 'input window, operand 2, single buffered']
    #allocation8 [shape = 'u8[65536]{0}', space=vmem, size = 0x10000, scoped, tag = 'input window, operand 3, single buffered']
    #allocation9 [shape = 's32[1]{0}', space=sflag, size = 0x4, scoped, tag = 'scoped memory for tpu_custom_call.1']
    #allocation10 [shape = 'u8[512]{0}', space=vmem, size = 0x400, scoped, tag = 'input window, operand 4, single buffered']
    #allocation11 [shape = 'u8[65536]{0}', space=vmem, size = 0x10000, scoped, tag = 'input window, operand 5, single buffered']
    #allocation12 [shape = 's32[1]{0}', space=sflag, size = 0x4, scoped, tag = 'scoped memory for tpu_custom_call.1']
    #allocation13 [shape = 'u8[512]{0}', space=vmem, size = 0x400, scoped, tag = 'input window, operand 6, single buffered']
    #allocation14 [shape = 'u8[4096]{0}', space=vmem, size = 0x1000, scoped, tag = 'output window, operand 0, single buffered']
    %12 = vsyncpa [#allocation3], 0
    %13 = vsyncpa [#allocation6], 0
    %14 = vsyncpa [#allocation9], 0
    %15 = vsyncpa [#allocation12], 0
    %16 = vsyncpa [#allocation4], 0
    // Predicated region
    $region2: #{tpu_custom_call.1} parent=1 // pred_check
      _
    $region3: #{tpu_custom_call.1} parent=1 // pred_check_branch
      %18 = sbr.rel (0) target = $region5
    $region4: #{tpu_custom_call.1} parent=1 // pred_region
      %s20 = ssub.s32 128, 128
      %21 = vsyncadd [#allocation3], %s20
      %s23 = sshll.u32 [#allocation2], 4
      %s24 = int_to_ptr.vmem [resolvable:$true] %s23
      %26 = dma.hbm_to_vmem [thread:$0]  %s0, 128, %s24, [#allocation3]
    $region5: #{tpu_custom_call.1} parent=1 // pred_fallthru
      _
    // Predicated region
    $region6: #{tpu_custom_call.1} parent=1 // pred_check
      _
    $region7: #{tpu_custom_call.1} parent=1 // pred_check_branch
      %28 = sbr.rel (0) target = $region9
    $region8: #{tpu_custom_call.1} parent=1 // pred_region
      %s30 = ssub.s32 2048, 2048
      %31 = vsyncadd [#allocation6], %s30
      %s32 = sshll.u32 [#allocation5], 4
      %s33 = int_to_ptr.vmem [resolvable:$true] %s32
      %38 = dma.hbm_to_vmem [thread:$0]  %s1, 2048, %s33, [#allocation6], 128, 128, 8
    $region9: #{tpu_custom_call.1} parent=1 // pred_fallthru
      _
    // Predicated region
    $region10: #{tpu_custom_call.1} parent=1 // pred_check
      _
    $region11: #{tpu_custom_call.1} parent=1 // pred_check_branch
      %40 = sbr.rel (0) target = $region13
    $region12: #{tpu_custom_call.1} parent=1 // pred_region
      %s42 = ssub.s32 16, 16
      %43 = vsyncadd [#allocation6], %s42
      %s45 = sshll.u32 [#allocation7], 4
      %s46 = int_to_ptr.vmem [resolvable:$true] %s45
      %48 = dma.hbm_to_vmem [thread:$0]  %s2, 16, %s46, [#allocation6]
    $region13: #{tpu_custom_call.1} parent=1 // pred_fallthru
      _
    // Predicated region
    $region14: #{tpu_custom_call.1} parent=1 // pred_check
      _
    $region15: #{tpu_custom_call.1} parent=1 // pred_check_branch
      %50 = sbr.rel (0) target = $region17
    $region16: #{tpu_custom_call.1} parent=1 // pred_region
      %s52 = ssub.s32 2048, 2048
      %53 = vsyncadd [#allocation9], %s52
      %s54 = sshll.u32 [#allocation8], 4
      %s55 = int_to_ptr.vmem [resolvable:$true] %s54
      %60 = dma.hbm_to_vmem [thread:$0]  %s3, 2048, %s55, [#allocation9], 128, 128, 8
    $region17: #{tpu_custom_call.1} parent=1 // pred_fallthru
      _
    // Predicated region
    $region18: #{tpu_custom_call.1} parent=1 // pred_check
      _
    $region19: #{tpu_custom_call.1} parent=1 // pred_check_branch
      %62 = sbr.rel (0) target = $region21
    $region20: #{tpu_custom_call.1} parent=1 // pred_region
      %s64 = ssub.s32 16, 16
      %65 = vsyncadd [#allocation9], %s64
      %s67 = sshll.u32 [#allocation10], 4
      %s68 = int_to_ptr.vmem [resolvable:$true] %s67
      %70 = dma.hbm_to_vmem [thread:$0]  %s4, 16, %s68, [#allocation9]
    $region21: #{tpu_custom_call.1} parent=1 // pred_fallthru
      _
    // Predicated region
    $region22: #{tpu_custom_call.1} parent=1 // pred_check
      _
    $region23: #{tpu_custom_call.1} parent=1 // pred_check_branch
      %72 = sbr.rel (0) target = $region25
    $region24: #{tpu_custom_call.1} parent=1 // pred_region
      %s74 = ssub.s32 2048, 2048
      %75 = vsyncadd [#allocation12], %s74
      %s76 = sshll.u32 [#allocation11], 4
      %s77 = int_to_ptr.vmem [resolvable:$true] %s76
      %82 = dma.hbm_to_vmem [thread:$0]  %s5, 2048, %s77, [#allocation12], 128, 128, 8
    $region25: #{tpu_custom_call.1} parent=1 // pred_fallthru
      _
    // Predicated region
    $region26: #{tpu_custom_call.1} parent=1 // pred_check
      _
    $region27: #{tpu_custom_call.1} parent=1 // pred_check_branch
      %84 = sbr.rel (0) target = $region29
    $region28: #{tpu_custom_call.1} parent=1 // pred_region
      %s86 = ssub.s32 16, 16
      %87 = vsyncadd [#allocation12], %s86
      %s89 = sshll.u32 [#allocation13], 4
      %s90 = int_to_ptr.vmem [resolvable:$true] %s89
      %92 = dma.hbm_to_vmem [thread:$0]  %s6, 16, %s90, [#allocation12]
    $region29: #{tpu_custom_call.1} parent=1 // pred_fallthru
      _
    // Predicated region
    $region30: #{tpu_custom_call.1} parent=1 // pred_check
      _
    $region31: #{tpu_custom_call.1} parent=1 // pred_check_branch
      %94 = sbr.rel (0) target = $region33
    $region32: #{tpu_custom_call.1} parent=1 // pred_region
      %95 = dma.done [#allocation3], 128
    $region33: #{tpu_custom_call.1} parent=1 // pred_fallthru
      _
    // Predicated region
    $region34: #{tpu_custom_call.1} parent=1 // pred_check
      _
    $region35: #{tpu_custom_call.1} parent=1 // pred_check_branch
      %97 = sbr.rel (0) target = $region37
    $region36: #{tpu_custom_call.1} parent=1 // pred_region
      %98 = dma.done [#allocation6], 2048
    $region37: #{tpu_custom_call.1} parent=1 // pred_fallthru
      _
    // Predicated region
    $region38: #{tpu_custom_call.1} parent=1 // pred_check
      _
    $region39: #{tpu_custom_call.1} parent=1 // pred_check_branch
      %100 = sbr.rel (0) target = $region41
    $region40: #{tpu_custom_call.1} parent=1 // pred_region
      %101 = dma.done [#allocation6], 16
    $region41: #{tpu_custom_call.1} parent=1 // pred_fallthru
      _
    // Predicated region
    $region42: #{tpu_custom_call.1} parent=1 // pred_check
      _
    $region43: #{tpu_custom_call.1} parent=1 // pred_check_branch
      %103 = sbr.rel (0) target = $region45
    $region44: #{tpu_custom_call.1} parent=1 // pred_region
      %104 = dma.done [#allocation9], 2048
    $region45: #{tpu_custom_call.1} parent=1 // pred_fallthru
      _
    // Predicated region
    $region46: #{tpu_custom_call.1} parent=1 // pred_check
      _
    $region47: #{tpu_custom_call.1} parent=1 // pred_check_branch
      %106 = sbr.rel (0) target = $region49
    $region48: #{tpu_custom_call.1} parent=1 // pred_region
      %107 = dma.done [#allocation9], 16
    $region49: #{tpu_custom_call.1} parent=1 // pred_fallthru
      _
    // Predicated region
    $region50: #{tpu_custom_call.1} parent=1 // pred_check
      _
    $region51: #{tpu_custom_call.1} parent=1 // pred_check_branch
      %109 = sbr.rel (0) target = $region53
    $region52: #{tpu_custom_call.1} parent=1 // pred_region
      %110 = dma.done [#allocation12], 2048
    $region53: #{tpu_custom_call.1} parent=1 // pred_fallthru
      _
    // Predicated region
    $region54: #{tpu_custom_call.1} parent=1 // pred_check
      _
    $region55: #{tpu_custom_call.1} parent=1 // pred_check_branch
      %112 = sbr.rel (0) target = $region57
    $region56: #{tpu_custom_call.1} parent=1 // pred_region
      %113 = dma.done [#allocation12], 16
    $region57: #{tpu_custom_call.1} parent=1 // pred_fallthru
      _
    %v114 = vld [vmem:[#allocation2] sm:$0xff]
    %v115 = vmax.f32 %v114, 1.0
    %v116 = vlog2.pop %v115
    %v117 = vmul.f32 %v116, 0.6931472
    %v118 = vrcp.pop 0.6931472
    %v119 = vmul.f32 %v117, %v118
    %vm120 = vcmp.lt.f32.partialorder %v119, 1.0
    %v121 = vsel %vm120, 0.0, %v119
    %v122 = vld [vmem:[#allocation5] sm:$0xff]
    %v123 = vld [vmem:[#allocation5 + $0x8] sm:$0xff]
    %v124 = vld [vmem:[#allocation5 + $0x10] sm:$0xff]
    %v125 = vld [vmem:[#allocation5 + $0x18] sm:$0xff]
    %v126 = vld [vmem:[#allocation5 + $0x20] sm:$0xff]
    %v127 = vld [vmem:[#allocation5 + $0x28] sm:$0xff]
    %v128 = vld [vmem:[#allocation5 + $0x30] sm:$0xff]
    %v129 = vld [vmem:[#allocation5 + $0x38] sm:$0xff]
    %v130 = vld [vmem:[#allocation5 + $0x40] sm:$0xff]
    %v131 = vld [vmem:[#allocation5 + $0x48] sm:$0xff]
    %v132 = vld [vmem:[#allocation5 + $0x50] sm:$0xff]
    %v133 = vld [vmem:[#allocation5 + $0x58] sm:$0xff]
    %v134 = vld [vmem:[#allocation5 + $0x60] sm:$0xff]
    %v135 = vld [vmem:[#allocation5 + $0x68] sm:$0xff]
    %v136 = vld [vmem:[#allocation5 + $0x70] sm:$0xff]
    %v137 = vld [vmem:[#allocation5 + $0x78] sm:$0xff]
    %v138 = vld [vmem:[#allocation7] sm:$0x1]
    %v140 = vlaneseq
    %v141 = vshrl.u32 %v140, 7
    %v142 = vsub.s32 0, %v141
    %v143 = vrot.slane %v138, %v142
    %145 = vmatprep.subr.mxu0 0.0
    %146 = vmatpush1.msra.mxu0 %v122
    %147 = vmatprep.subr.mxu0 0.0
    %148 = vmatpush1.msra.mxu0 %v123
    %149 = vmatprep.subr.mxu0 0.0
    %150 = vmatpush1.msra.mxu0 %v124
    %151 = vmatprep.subr.mxu0 0.0
    %152 = vmatpush1.msra.mxu0 %v125
    %153 = vmatprep.subr.mxu0 0.0
    %154 = vmatpush1.msra.mxu0 %v126
    %155 = vmatprep.subr.mxu0 0.0
    %156 = vmatpush1.msra.mxu0 %v127
    %157 = vmatprep.subr.mxu0 0.0
    %158 = vmatpush1.msra.mxu0 %v128
    %159 = vmatprep.subr.mxu0 0.0
    %160 = vmatpush1.msra.mxu0 %v129
    %161 = vmatprep.subr.mxu0 0.0
    %162 = vmatpush1.msra.mxu0 %v130
    %163 = vmatprep.subr.mxu0 0.0
    %164 = vmatpush1.msra.mxu0 %v131
    %165 = vmatprep.subr.mxu0 0.0
    %166 = vmatpush1.msra.mxu0 %v132
    %167 = vmatprep.subr.mxu0 0.0
    %168 = vmatpush1.msra.mxu0 %v133
    %169 = vmatprep.subr.mxu0 0.0
    %170 = vmatpush1.msra.mxu0 %v134
    %171 = vmatprep.subr.mxu0 0.0
    %172 = vmatpush1.msra.mxu0 %v135
    %173 = vmatprep.subr.mxu0 0.0
    %174 = vmatpush1.msra.mxu0 %v136
    %175 = vmatprep.subr.mxu0 0.0
    %176 = vmatpush1.msra.mxu0 %v137
    %177 = vmatprep.subr.mxu0 0.0
    %178 = vmatpush1.msra.mxu0 0.0
    %179 = vmatprep.subr.mxu0 0.0
    %180 = vmatpush1.msra.mxu0 0.0
    %181 = vmatprep.subr.mxu0 0.0
    %182 = vmatpush1.msra.mxu0 0.0
    %183 = vmatprep.subr.mxu0 0.0
    %184 = vmatpush1.msra.mxu0 0.0
    %185 = vmatprep.subr.mxu0 0.0
    %186 = vmatpush1.msra.mxu0 0.0
    %187 = vmatprep.subr.mxu0 0.0
    %188 = vmatpush1.msra.mxu0 0.0
    %189 = vmatprep.subr.mxu0 0.0
    %190 = vmatpush1.msra.mxu0 0.0
    %191 = vmatprep.subr.mxu0 0.0
    %192 = vmatpush1.msra.mxu0 0.0
    %193 = vmatprep.subr.mxu0 0.0
    %194 = vmatpush1.msra.mxu0 0.0
    %195 = vmatprep.subr.mxu0 0.0
    %196 = vmatpush1.msra.mxu0 0.0
    %197 = vmatprep.subr.mxu0 0.0
    %198 = vmatpush1.msra.mxu0 0.0
    %199 = vmatprep.subr.mxu0 0.0
    %200 = vmatpush1.msra.mxu0 0.0
    %201 = vmatprep.subr.mxu0 0.0
    %202 = vmatpush1.msra.mxu0 0.0
    %203 = vmatprep.subr.mxu0 0.0
    %204 = vmatpush1.msra.mxu0 0.0
    %205 = vmatprep.subr.mxu0 0.0
    %206 = vmatpush1.msra.mxu0 0.0
    %207 = vmatprep.subr.mxu0 0.0
    %208 = vmatpush1.msra.mxu0 0.0
    %209 = vmatprep.mubr.f32.mxu0 0.0
    %210 = vmatmul.mubr.f32.gmra.mrb[0].mxu0 %v121
    %v211 = vpop.f32.mrb[0].mxu0
    %v212 = vadd.f32 %v143, %v211
    %v213 = vpop.f32.mrb[0].mxu0
    %214 = vdwg.mxu0
    %v215 = vmax.f32 %v212, 0.0
    %v216 = vld [vmem:[#allocation8] sm:$0xff]
    %v217 = vld [vmem:[#allocation8 + $0x8] sm:$0xff]
    %v218 = vld [vmem:[#allocation8 + $0x10] sm:$0xff]
    %v219 = vld [vmem:[#allocation8 + $0x18] sm:$0xff]
    %v220 = vld [vmem:[#allocation8 + $0x20] sm:$0xff]
    %v221 = vld [vmem:[#allocation8 + $0x28] sm:$0xff]
    %v222 = vld [vmem:[#allocation8 + $0x30] sm:$0xff]
    %v223 = vld [vmem:[#allocation8 + $0x38] sm:$0xff]
    %v224 = vld [vmem:[#allocation8 + $0x40] sm:$0xff]
    %v225 = vld [vmem:[#allocation8 + $0x48] sm:$0xff]
    %v226 = vld [vmem:[#allocation8 + $0x50] sm:$0xff]
    %v227 = vld [vmem:[#allocation8 + $0x58] sm:$0xff]
    %v228 = vld [vmem:[#allocation8 + $0x60] sm:$0xff]
    %v229 = vld [vmem:[#allocation8 + $0x68] sm:$0xff]
    %v230 = vld [vmem:[#allocation8 + $0x70] sm:$0xff]
    %v231 = vld [vmem:[#allocation8 + $0x78] sm:$0xff]
    %v232 = vld [vmem:[#allocation10] sm:$0x1]
    %v234 = vlaneseq
    %v235 = vshrl.u32 %v234, 7
    %v236 = vsub.s32 0, %v235
    %v237 = vrot.slane %v232, %v236
    %239 = vmatprep.subr.mxu0 0.0
    %240 = vmatpush1.msra.mxu0 %v216
    %241 = vmatprep.subr.mxu0 0.0
    %242 = vmatpush1.msra.mxu0 %v217
    %243 = vmatprep.subr.mxu0 0.0
    %244 = vmatpush1.msra.mxu0 %v218
    %245 = vmatprep.subr.mxu0 0.0
    %246 = vmatpush1.msra.mxu0 %v219
    %247 = vmatprep.subr.mxu0 0.0
    %248 = vmatpush1.msra.mxu0 %v220
    %249 = vmatprep.subr.mxu0 0.0
    %250 = vmatpush1.msra.mxu0 %v221
    %251 = vmatprep.subr.mxu0 0.0
    %252 = vmatpush1.msra.mxu0 %v222
    %253 = vmatprep.subr.mxu0 0.0
    %254 = vmatpush1.msra.mxu0 %v223
    %255 = vmatprep.subr.mxu0 0.0
    %256 = vmatpush1.msra.mxu0 %v224
    %257 = vmatprep.subr.mxu0 0.0
    %258 = vmatpush1.msra.mxu0 %v225
    %259 = vmatprep.subr.mxu0 0.0
    %260 = vmatpush1.msra.mxu0 %v226
    %261 = vmatprep.subr.mxu0 0.0
    %262 = vmatpush1.msra.mxu0 %v227
    %263 = vmatprep.subr.mxu0 0.0
    %264 = vmatpush1.msra.mxu0 %v228
    %265 = vmatprep.subr.mxu0 0.0
    %266 = vmatpush1.msra.mxu0 %v229
    %267 = vmatprep.subr.mxu0 0.0
    %268 = vmatpush1.msra.mxu0 %v230
    %269 = vmatprep.subr.mxu0 0.0
    %270 = vmatpush1.msra.mxu0 %v231
    %271 = vmatprep.subr.mxu0 0.0
    %272 = vmatpush1.msra.mxu0 0.0
    %273 = vmatprep.subr.mxu0 0.0
    %274 = vmatpush1.msra.mxu0 0.0
    %275 = vmatprep.subr.mxu0 0.0
    %276 = vmatpush1.msra.mxu0 0.0
    %277 = vmatprep.subr.mxu0 0.0
    %278 = vmatpush1.msra.mxu0 0.0
    %279 = vmatprep.subr.mxu0 0.0
    %280 = vmatpush1.msra.mxu0 0.0
    %281 = vmatprep.subr.mxu0 0.0
    %282 = vmatpush1.msra.mxu0 0.0
    %283 = vmatprep.subr.mxu0 0.0
    %284 = vmatpush1.msra.mxu0 0.0
    %285 = vmatprep.subr.mxu0 0.0
    %286 = vmatpush1.msra.mxu0 0.0
    %287 = vmatprep.subr.mxu0 0.0
    %288 = vmatpush1.msra.mxu0 0.0
    %289 = vmatprep.subr.mxu0 0.0
    %290 = vmatpush1.msra.mxu0 0.0
    %291 = vmatprep.subr.mxu0 0.0
    %292 = vmatpush1.msra.mxu0 0.0
    %293 = vmatprep.subr.mxu0 0.0
    %294 = vmatpush1.msra.mxu0 0.0
    %295 = vmatprep.subr.mxu0 0.0
    %296 = vmatpush1.msra.mxu0 0.0
    %297 = vmatprep.subr.mxu0 0.0
    %298 = vmatpush1.msra.mxu0 0.0
    %299 = vmatprep.subr.mxu0 0.0
    %300 = vmatpush1.msra.mxu0 0.0
    %301 = vmatprep.subr.mxu0 0.0
    %302 = vmatpush1.msra.mxu0 0.0
    %303 = vmatprep.mubr.f32.mxu0 0.0
    %304 = vmatmul.mubr.f32.gmra.mrb[0].mxu0 %v215
    %v305 = vpop.f32.mrb[0].mxu0
    %v306 = vadd.f32 %v237, %v305
    %v307 = vpop.f32.mrb[0].mxu0
    %308 = vdwg.mxu0
    %v309 = vmax.f32 %v306, 0.0
    %v310 = vld [vmem:[#allocation11] sm:$0xff]
    %v311 = vld [vmem:[#allocation11 + $0x8] sm:$0xff]
    %v312 = vld [vmem:[#allocation11 + $0x10] sm:$0xff]
    %v313 = vld [vmem:[#allocation11 + $0x18] sm:$0xff]
    %v314 = vld [vmem:[#allocation11 + $0x20] sm:$0xff]
    %v315 = vld [vmem:[#allocation11 + $0x28] sm:$0xff]
    %v316 = vld [vmem:[#allocation11 + $0x30] sm:$0xff]
    %v317 = vld [vmem:[#allocation11 + $0x38] sm:$0xff]
    %v318 = vld [vmem:[#allocation11 + $0x40] sm:$0xff]
    %v319 = vld [vmem:[#allocation11 + $0x48] sm:$0xff]
    %v320 = vld [vmem:[#allocation11 + $0x50] sm:$0xff]
    %v321 = vld [vmem:[#allocation11 + $0x58] sm:$0xff]
    %v322 = vld [vmem:[#allocation11 + $0x60] sm:$0xff]
    %v323 = vld [vmem:[#allocation11 + $0x68] sm:$0xff]
    %v324 = vld [vmem:[#allocation11 + $0x70] sm:$0xff]
    %v325 = vld [vmem:[#allocation11 + $0x78] sm:$0xff]
    %v326 = vld [vmem:[#allocation13] sm:$0x1]
    %v328 = vlaneseq
    %v329 = vshrl.u32 %v328, 7
    %v330 = vsub.s32 0, %v329
    %v331 = vrot.slane %v326, %v330
    %333 = vmatprep.subr.mxu0 0.0
    %334 = vmatpush1.msra.mxu0 %v310
    %335 = vmatprep.subr.mxu0 0.0
    %336 = vmatpush1.msra.mxu0 %v311
    %337 = vmatprep.subr.mxu0 0.0
    %338 = vmatpush1.msra.mxu0 %v312
    %339 = vmatprep.subr.mxu0 0.0
    %340 = vmatpush1.msra.mxu0 %v313
    %341 = vmatprep.subr.mxu0 0.0
    %342 = vmatpush1.msra.mxu0 %v314
    %343 = vmatprep.subr.mxu0 0.0
    %344 = vmatpush1.msra.mxu0 %v315
    %345 = vmatprep.subr.mxu0 0.0
    %346 = vmatpush1.msra.mxu0 %v316
    %347 = vmatprep.subr.mxu0 0.0
    %348 = vmatpush1.msra.mxu0 %v317
    %349 = vmatprep.subr.mxu0 0.0
    %350 = vmatpush1.msra.mxu0 %v318
    %351 = vmatprep.subr.mxu0 0.0
    %352 = vmatpush1.msra.mxu0 %v319
    %353 = vmatprep.subr.mxu0 0.0
    %354 = vmatpush1.msra.mxu0 %v320
    %355 = vmatprep.subr.mxu0 0.0
    %356 = vmatpush1.msra.mxu0 %v321
    %357 = vmatprep.subr.mxu0 0.0
    %358 = vmatpush1.msra.mxu0 %v322
    %359 = vmatprep.subr.mxu0 0.0
    %360 = vmatpush1.msra.mxu0 %v323
    %361 = vmatprep.subr.mxu0 0.0
    %362 = vmatpush1.msra.mxu0 %v324
    %363 = vmatprep.subr.mxu0 0.0
    %364 = vmatpush1.msra.mxu0 %v325
    %365 = vmatprep.subr.mxu0 0.0
    %366 = vmatpush1.msra.mxu0 0.0
    %367 = vmatprep.subr.mxu0 0.0
    %368 = vmatpush1.msra.mxu0 0.0
    %369 = vmatprep.subr.mxu0 0.0
    %370 = vmatpush1.msra.mxu0 0.0
    %371 = vmatprep.subr.mxu0 0.0
    %372 = vmatpush1.msra.mxu0 0.0
    %373 = vmatprep.subr.mxu0 0.0
    %374 = vmatpush1.msra.mxu0 0.0
    %375 = vmatprep.subr.mxu0 0.0
    %376 = vmatpush1.msra.mxu0 0.0
    %377 = vmatprep.subr.mxu0 0.0
    %378 = vmatpush1.msra.mxu0 0.0
    %379 = vmatprep.subr.mxu0 0.0
    %380 = vmatpush1.msra.mxu0 0.0
    %381 = vmatprep.subr.mxu0 0.0
    %382 = vmatpush1.msra.mxu0 0.0
    %383 = vmatprep.subr.mxu0 0.0
    %384 = vmatpush1.msra.mxu0 0.0
    %385 = vmatprep.subr.mxu0 0.0
    %386 = vmatpush1.msra.mxu0 0.0
    %387 = vmatprep.subr.mxu0 0.0
    %388 = vmatpush1.msra.mxu0 0.0
    %389 = vmatprep.subr.mxu0 0.0
    %390 = vmatpush1.msra.mxu0 0.0
    %391 = vmatprep.subr.mxu0 0.0
    %392 = vmatpush1.msra.mxu0 0.0
    %393 = vmatprep.subr.mxu0 0.0
    %394 = vmatpush1.msra.mxu0 0.0
    %395 = vmatprep.subr.mxu0 0.0
    %396 = vmatpush1.msra.mxu0 0.0
    %397 = vmatprep.mubr.f32.mxu0 0.0
    %398 = vmatmul.mubr.f32.gmra.mrb[0].mxu0 %v309
    %v399 = vpop.f32.mrb[0].mxu0
    %v400 = vadd.f32 %v331, %v399
    %v401 = vpop.f32.mrb[0].mxu0
    %402 = vdwg.mxu0
    %v403 = vmax.f32 %v400, 0.0
    %404 = vst [vmem:[#allocation14] sm:$0xff] %v403
    // Predicated region
    $region58: #{tpu_custom_call.1} parent=1 // pred_check
      _
    $region59: #{tpu_custom_call.1} parent=1 // pred_check_branch
      %406 = sbr.rel (0) target = $region61
    $region60: #{tpu_custom_call.1} parent=1 // pred_region
      %s408 = ssub.s32 128, 128
      %409 = vsyncadd [#allocation4], %s408
      %s411 = sshll.u32 [#allocation14], 4
      %s412 = int_to_ptr.vmem [resolvable:$true] %s411
      %414 = dma.vmem_to_hbm [thread:$0]  %s412, 128, %s7, [#allocation4]
    $region61: #{tpu_custom_call.1} parent=1 // pred_fallthru
      _
    // Predicated region
    $region62: #{tpu_custom_call.1} parent=1 // pred_check
      _
    $region63: #{tpu_custom_call.1} parent=1 // pred_check_branch
      %416 = sbr.rel (0) target = $region65
    $region64: #{tpu_custom_call.1} parent=1 // pred_region
      %417 = dma.done [#allocation4], 128
    $region65: #{tpu_custom_call.1} parent=1 // pred_fallthru
      _
    %418 = vsyncpa [#allocation3], 1
    %419 = vsyncpa [#allocation6], 1
    %420 = vsyncpa [#allocation9], 1
    %421 = vsyncpa [#allocation12], 1
    %422 = vsyncpa [#allocation4], 1

</llo_original>
